<compile_context>
chip_gen: v6e
topology: v6e:2x2x1
jax: 0.10.0
libtpu: 0.0.40
codegen_flags: <defaults>
</compile_context>

<pallas_src>
import functools

import numpy as np

import jax
import jax.numpy as jnp
from jax.experimental import pallas as pl
from jax.experimental.pallas import tpu as pltpu


def _series_decomp_kernel(w_ref, x_ref, mean_ref, res_ref, *, b_block: int):
    """mean = W @ x (banded averaging matmul on the MXU); res = x - mean."""
    w = w_ref[...]  # (L, L) f32, VMEM-resident across the whole grid.
    # Static unroll over the folded batch elements in this block.
    for b in range(b_block):
        xb = x_ref[b].astype(jnp.float32)                      # (L, c_block)
        mean = jnp.dot(w, xb, preferred_element_type=jnp.float32)  # MXU
        mean_ref[b] = mean.astype(mean_ref.dtype)
        res_ref[b] = (xb - mean).astype(res_ref.dtype)


def _build_avg_matrix(seq_len: int, kernel_size: int) -> jax.Array:
    """(L, L) f32 matrix with mean[t] = sum_s W[t, s] * x[s].

    Encodes both the 1/k moving-average bands and the edge replication
    (clamped indices fold extra weight onto the first / last columns).
    """
    pad = (kernel_size - 1) // 2
    counts = np.zeros((seq_len, seq_len), dtype=np.float64)
    for t in range(seq_len):
        for i in range(kernel_size):
            s = min(max(t + i - pad, 0), seq_len - 1)
            counts[t, s] += 1.0
    return jnp.asarray((counts / float(kernel_size)).astype(np.float32))


def series_decomp(x: jax.Array, kernel_size: int):
    """JAX/Pallas equivalent of series_decomp.forward. x: (B, L, C)."""
    assert kernel_size % 2 == 1, (
        "series_decomp Pallas kernel matches the PyTorch module only for odd "
        "kernel_size (even k changes the AvgPool1d output length).")
    B, L, C = x.shape
    itemsize = jnp.dtype(x.dtype).itemsize
    w_bytes = L * L * 4

    # Generation-aware VMEM budget (64 MiB fallback covers v7x per-core VMEM).
    try:
        vmem_cap = int(pltpu.get_tpu_info().vmem_capacity_bytes)
    except Exception:  # pragma: no cover - e.g. interpret mode / CPU host
        vmem_cap = 64 * 1024 * 1024
    budget = int(0.6 * vmem_cap)

    # Channel (lane) block: always a multiple of 128 when C >= 128 so stores
    # stay unmasked and the footprint is bounded in C; the last partial tile
    # may overhang C (OOB reads padded, OOB writes masked -- correct because
    # each output column depends only on its own input column).  For small
    # channel counts use the full C (lane masking is unavoidable either way).
    if C >= 128:
        c_block = 128 * min(max(C // 128, 1), 4)  # up to 512 lanes
    else:
        c_block = C

    def footprint(bb: int, cb: int) -> int:
        block = bb * L * cb * itemsize
        # 1 input + 2 output streams, double-buffered, resident W, f32 temps.
        return 3 * 2 * block + w_bytes + 2 * bb * L * cb * 4

    while c_block > 128 and footprint(1, c_block) > budget:
        c_block -= 128

    n_ctiles = pl.cdiv(C, c_block)

    # Fold batch elements per grid step to amortize per-step overhead when the
    # (L, C) tile is tiny (the realistic NLinear case: C = 7..21).
    b_block = 1
    target_step_bytes = 1 << 20  # ~1 MiB of input per step
    while (b_block < B
           and footprint(2 * b_block, c_block) <= budget
           and b_block * L * c_block * itemsize < target_step_bytes):
        b_block *= 2
    # Keep at least 2 grid steps when possible so both v7x TensorCores get work.
    if n_ctiles == 1 and B > 1:
        b_block = min(b_block, max(1, (B + 1) // 2))

    grid = (pl.cdiv(B, b_block), n_ctiles)

    vmem_limit = int(min(max(2 * footprint(b_block, c_block), 32 * 1024 * 1024),
                         budget))

    w = _build_avg_matrix(L, kernel_size)

    kernel = functools.partial(_series_decomp_kernel, b_block=b_block)

    # W stays resident: constant block index -> no re-DMA across grid steps.
    w_spec = pl.BlockSpec((L, L), lambda b, c: (0, 0))
    xo_spec = pl.BlockSpec((b_block, L, c_block), lambda b, c: (b, 0, c))

    cost = pl.CostEstimate(
        flops=2 * B * L * L * C + B * L * C,
        transcendentals=0,
        bytes_accessed=3 * B * L * C * itemsize + w_bytes,
    )

    moving_mean, residual = pl.pallas_call(
        kernel,
        out_shape=(
            jax.ShapeDtypeStruct((B, L, C), x.dtype),
            jax.ShapeDtypeStruct((B, L, C), x.dtype),
        ),
        grid=grid,
        in_specs=[w_spec, xo_spec],
        out_specs=(xo_spec, xo_spec),
        compiler_params=pltpu.CompilerParams(
            dimension_semantics=("parallel", "parallel"),
            vmem_limit_bytes=vmem_limit,
        ),
        cost_estimate=cost,
    )(w, x)
    return moving_mean, residual


def _reference(x, kernel_size):
    """Pure-JAX reference mirroring the PyTorch module."""
    pad = (kernel_size - 1) // 2
    front = jnp.repeat(x[:, 0:1, :], pad, axis=1)
    end = jnp.repeat(x[:, -1:, :], pad, axis=1)
    xpad = jnp.concatenate([front, x, end], axis=1)
    L = x.shape[1]
    windows = jnp.stack(
        [xpad[:, i:i + L, :] for i in range(kernel_size)], axis=0)
    mean = jnp.mean(windows, axis=0)
    return mean, x - mean


if __name__ == "__main__":
    # Small shapes consistent with the module: (batch, seq_len, channels).
    B, L, C = 2, 8, 4
    kernel_size = 5  # odd kernel, as used in NLinear / Autoformer

    key = jax.random.PRNGKey(0)
    x = jax.random.normal(key, (B, L, C), dtype=jnp.float32)

    moving_mean, residual = series_decomp(x, kernel_size)
    jax.block_until_ready((moving_mean, residual))

    ref_mean, ref_res = _reference(x, kernel_size)
    assert jnp.allclose(moving_mean, ref_mean, atol=1e-5, rtol=1e-5)
    assert jnp.allclose(residual, ref_res, atol=1e-5, rtol=1e-5)

    print("KERNEL_OK")
</pallas_src>

<mosaic_0001>
module attributes {stable_mosaic.version = 11 : i64} {
  func.func @_series_decomp_kernel(%arg0: i32, %arg1: i32, %arg2: memref<8x8xf32, #tpu.memory_space<vmem>>, %arg3: memref<1x8x4xf32, #tpu.memory_space<vmem>>, %arg4: memref<1x8x4xf32, #tpu.memory_space<vmem>>, %arg5: memref<1x8x4xf32, #tpu.memory_space<vmem>>) attributes {dimension_semantics = [#tpu.dimension_semantics<parallel>, #tpu.dimension_semantics<parallel>], iteration_bounds = array<i64: 2, 1>, scalar_prefetch = 0 : i64, scratch_operands = 0 : i64, tpu.core_type = #tpu.core_type<tc>, window_params = [{pipeline_mode = #tpu.pipeline_mode<synchronous>, transform_indices = @transform_0, window_bounds = array<i64: 8, 8>}, {transform_indices = @transform_1, window_bounds = array<i64: 1, 8, 4>}, {transform_indices = @transform_2, window_bounds = array<i64: 1, 8, 4>}, {transform_indices = @transform_3, window_bounds = array<i64: 1, 8, 4>}]} {
    %c0 = arith.constant 0 : index
    %c0_0 = arith.constant 0 : index
    %0 = vector.load %arg2[%c0, %c0_0] : memref<8x8xf32, #tpu.memory_space<vmem>>, vector<8x8xf32>
    %c0_1 = arith.constant 0 : index
    %c0_2 = arith.constant 0 : index
    %c0_3 = arith.constant 0 : index
    %1 = vector.load %arg3[%c0_1, %c0_2, %c0_3] : memref<1x8x4xf32, #tpu.memory_space<vmem>>, vector<1x8x4xf32>
    %2 = vector.shape_cast %1 : vector<1x8x4xf32> to vector<8x4xf32>
    %cst = arith.constant dense<0.000000e+00> : vector<8x4xf32>
    %3 = tpu.matmul %0, %2, %cst {dimension_numbers = #tpu.dot_dimension_numbers<[1], [0], [0], [1], [0, 0, 1, 1], [], []>} : vector<8x8xf32>, vector<8x4xf32>, vector<8x4xf32> -> vector<8x4xf32>
    %c0_4 = arith.constant 0 : index
    %c0_5 = arith.constant 0 : index
    %c0_6 = arith.constant 0 : index
    %4 = vector.load %arg4[%c0_4, %c0_5, %c0_6] : memref<1x8x4xf32, #tpu.memory_space<vmem>>, vector<1x8x4xf32>
    %5 = vector.shape_cast %4 : vector<1x8x4xf32> to vector<8x4xf32>
    %6 = vector.shape_cast %3 : vector<8x4xf32> to vector<1x8x4xf32>
    tpu.vector_store %arg4[%c0_4, %c0_5, %c0_6], %6 {strides = array<i32>} : memref<1x8x4xf32, #tpu.memory_space<vmem>>, vector<1x8x4xf32>,
    %7 = arith.subf %2, %3 : vector<8x4xf32>
    %c0_7 = arith.constant 0 : index
    %c0_8 = arith.constant 0 : index
    %c0_9 = arith.constant 0 : index
    %8 = vector.load %arg5[%c0_7, %c0_8, %c0_9] : memref<1x8x4xf32, #tpu.memory_space<vmem>>, vector<1x8x4xf32>
    %9 = vector.shape_cast %8 : vector<1x8x4xf32> to vector<8x4xf32>
    %10 = vector.shape_cast %7 : vector<8x4xf32> to vector<1x8x4xf32>
    tpu.vector_store %arg5[%c0_7, %c0_8, %c0_9], %10 {strides = array<i32>} : memref<1x8x4xf32, #tpu.memory_space<vmem>>, vector<1x8x4xf32>,
    return
  }
  func.func @transform_0(%arg0: i32, %arg1: i32) -> (i32, i32) {
    %c0_i32 = arith.constant 0 : i32
    %c0_i32_0 = arith.constant 0 : i32
    %c0_i32_1 = arith.constant 0 : i32
    return %c0_i32, %c0_i32_0 : i32, i32
  }
  func.func @transform_1(%arg0: i32, %arg1: i32) -> (i32, i32, i32) {
    %c0_i32 = arith.constant 0 : i32
    %c0_i32_0 = arith.constant 0 : i32
    return %arg0, %c0_i32, %arg1 : i32, i32, i32
  }
  func.func @transform_2(%arg0: i32, %arg1: i32) -> (i32, i32, i32) {
    %c0_i32 = arith.constant 0 : i32
    %c0_i32_0 = arith.constant 0 : i32
    return %arg0, %c0_i32, %arg1 : i32, i32, i32
  }
  func.func @transform_3(%arg0: i32, %arg1: i32) -> (i32, i32, i32) {
    %c0_i32 = arith.constant 0 : i32
    %c0_i32_0 = arith.constant 0 : i32
    return %arg0, %c0_i32, %arg1 : i32, i32, i32
  }
}

</mosaic_0001>

<llo_original>
// kernel: tpu_custom_call.1
$region0: #{tpu_custom_call.1}
  #allocation0 [shape = 'u32[]', space=smem, size = 0x4, offset = 0x4, fixed_abs, tag = 'smem constant byte address 0x4 - core index']
  #allocation1 [shape = 'u32[144,128]{1,0:T(1,128)}', space=vmem, size = 0x12000, scoped, tag = 'internal scratch']
  %s0 = inlined_call_operand.vmem [shape: f32[8,8], index: 0, kind: input, shape index: {}]
  %s1 = inlined_call_operand.vmem [shape: f32[2,8,4], index: 1, kind: input, shape index: {}]
  %s2 = inlined_call_operand.vmem [shape: f32[2,8,4], index: 2, kind: output, shape index: {0}]
  %s3 = inlined_call_operand.vmem [shape: f32[2,8,4], index: 3, kind: output, shape index: {1}]
  %4 = xla_tuple %s2, %s3
  %s5 = sld [smem:[#allocation0]]
  $region49: #{tpu_custom_call.1} parent=0
    _
  %s7 = ssub.s32 1, %s5
  %s8 = scalar_select 0, %s7, %s5
  loop: start=0, step=1, limit=4
  $region2: #{tpu_custom_call.1} parent=0 // loop_pre_header
    _
  $region3: #{tpu_custom_call.1} parent=0 // loop_header
    %s10 = sphi 0, %s14
    %p11 = scmp.ge.s32.totalorder %s10, 4
    %s17 = sphi 0, %s29
    %s18 = sphi 0, %s25
    %s19 = sphi 0, %s17
    %s20 = sphi 0, %s18
    %s21 = sphi 0, %s19
    %s22 = sphi 0, %s20
    %s30 = sphi 0, %s30
    %s32 = sphi 0, %s30
    %s33 = sphi 0, %s32
    %s47 = sphi 0, %s33
    %s55 = sphi 0, %s57
    %s58 = sphi 0, %s55
    %s59 = sphi 0, %s58
    %s75 = sphi 0, %s59
    %s83 = sphi 0, %s85
    %s86 = sphi 0, %s83
    %s87 = sphi 0, %s86
    %s103 = sphi 0, %s87
    %s111 = sphi 0, %s113
    %s114 = sphi 0, %s111
    %s115 = sphi 0, %s114
    %s131 = sphi 0, %s115
  $region4: #{tpu_custom_call.1} parent=0 // loop_header_branch
    %13 = sbr.rel (%p11) target = $region8
  $region5: #{tpu_custom_call.1} parent=0 // loop_body
    %s15 = ssub.s32 %s10, 1
    %s16 = ssub.s32 %s10, 2
    %s23 = sadd.s32 1, %s18
    %p24 = scmp.ge.s32.totalorder %s23, 1
    %s25 = scalar_select %p24, 0, %s23
    %s26 = sadd.s32 1, %s17
    %s27 = scalar_select %p24, %s26, %s17
    %p28 = scmp.ge.s32.totalorder %s27, 2
    %s29 = scalar_select %p28, 0, %s27
    %s31 = sadd.s32 %s30, 1
    %p34 = scmp.eq.s32.totalorder %s10, 1
    %p35 = scmp.ne.s32.totalorder %s30, %s32
    %p36 = scmp.eq.s32.totalorder %s10, 0
    %p37 = por %p35, %p36
    %p38 = scmp.ne.s32.totalorder %s30, %s32
    %p39 = scmp.eq.s32.totalorder %s15, 1
    %p40 = por %p38, %p39
    %p41 = scmp.ne.s32.totalorder %s32, %s33
    %p42 = scmp.eq.s32.totalorder %s15, 0
    %p43 = por %p41, %p42
    %p44 = scmp.ne.s32.totalorder %s32, %s33
    %p45 = scmp.eq.s32.totalorder %s16, 1
    %p46 = por %p44, %p45
    %p48 = scmp.ne.s32.totalorder %s33, %s47
    %p49 = scmp.eq.s32.totalorder %s16, 0
    %p50 = por %p48, %p49
    %s51 = ssub.s32 %s17, %s29
    %s52 = ssub.s32 %s18, %s25
    %s53 = sor.u32 %s51, %s52
    %p54 = scmp.eq.s32.totalorder %s53, 0
    %s56 = sadd.s32 %s55, 1
    %s57 = scalar_select %p54, %s55, %s56
    %p60 = pneg %p54
    %p61 = scmp.eq.s32.totalorder %s10, 1
    %p62 = por %p60, %p61
    %p63 = scmp.ne.s32.totalorder %s55, %s58
    %p64 = scmp.eq.s32.totalorder %s10, 0
    %p65 = por %p63, %p64
    %p66 = scmp.ne.s32.totalorder %s55, %s58
    %p67 = scmp.eq.s32.totalorder %s15, 1
    %p68 = por %p66, %p67
    %p69 = scmp.ne.s32.totalorder %s58, %s59
    %p70 = scmp.eq.s32.totalorder %s15, 0
    %p71 = por %p69, %p70
    %p72 = scmp.ne.s32.totalorder %s58, %s59
    %p73 = scmp.eq.s32.totalorder %s16, 1
    %p74 = por %p72, %p73
    %p76 = scmp.ne.s32.totalorder %s59, %s75
    %p77 = scmp.eq.s32.totalorder %s16, 0
    %p78 = por %p76, %p77
    %s79 = ssub.s32 %s17, %s29
    %s80 = ssub.s32 %s18, %s25
    %s81 = sor.u32 %s79, %s80
    %p82 = scmp.eq.s32.totalorder %s81, 0
    %s84 = sadd.s32 %s83, 1
    %s85 = scalar_select %p82, %s83, %s84
    %p88 = pneg %p82
    %p89 = scmp.eq.s32.totalorder %s10, 1
    %p90 = por %p88, %p89
    %p91 = scmp.ne.s32.totalorder %s83, %s86
    %p92 = scmp.eq.s32.totalorder %s10, 0
    %p93 = por %p91, %p92
    %p94 = scmp.ne.s32.totalorder %s83, %s86
    %p95 = scmp.eq.s32.totalorder %s15, 1
    %p96 = por %p94, %p95
    %p97 = scmp.ne.s32.totalorder %s86, %s87
    %p98 = scmp.eq.s32.totalorder %s15, 0
    %p99 = por %p97, %p98
    %p100 = scmp.ne.s32.totalorder %s86, %s87
    %p101 = scmp.eq.s32.totalorder %s16, 1
    %p102 = por %p100, %p101
    %p104 = scmp.ne.s32.totalorder %s87, %s103
    %p105 = scmp.eq.s32.totalorder %s16, 0
    %p106 = por %p104, %p105
    %s107 = ssub.s32 %s17, %s29
    %s108 = ssub.s32 %s18, %s25
    %s109 = sor.u32 %s107, %s108
    %p110 = scmp.eq.s32.totalorder %s109, 0
    %s112 = sadd.s32 %s111, 1
    %s113 = scalar_select %p110, %s111, %s112
    %p116 = pneg %p110
    %p117 = scmp.eq.s32.totalorder %s10, 1
    %p118 = por %p116, %p117
    %p119 = scmp.ne.s32.totalorder %s111, %s114
    %p120 = scmp.eq.s32.totalorder %s10, 0
    %p121 = por %p119, %p120
    %p122 = scmp.ne.s32.totalorder %s111, %s114
    %p123 = scmp.eq.s32.totalorder %s15, 1
    %p124 = por %p122, %p123
    %p125 = scmp.ne.s32.totalorder %s114, %s115
    %p126 = scmp.eq.s32.totalorder %s15, 0
    %p127 = por %p125, %p126
    %p128 = scmp.ne.s32.totalorder %s114, %s115
    %p129 = scmp.eq.s32.totalorder %s16, 1
    %p130 = por %p128, %p129
    %p132 = scmp.ne.s32.totalorder %s115, %s131
    %p133 = scmp.eq.s32.totalorder %s16, 0
    %p134 = por %p132, %p133
    %p135 = scmp.le.s32.totalorder 1, %s10
    %p136 = scmp.lt.s32.totalorder %s10, 3
    %p137 = pnand %p135, %p136
    %p138 = pneg %p137
    // Predicated region
    $region9: #{tpu_custom_call.1} parent=5 // pred_check
      _
    $region10: #{tpu_custom_call.1} parent=5 // pred_check_branch
      %140 = sbr.rel (%p137) target = $region12
    $region11: #{tpu_custom_call.1} parent=5 // pred_region
      %s141 = ssub.s32 %s10, 1
      // Predicated region
      $region13: #{tpu_custom_call.1} parent=11 // pred_check
        %p142 = pneg %p43
      $region14: #{tpu_custom_call.1} parent=11 // pred_check_branch
        %144 = sbr.rel (%p142) target = $region16
      $region15: #{tpu_custom_call.1} parent=11 // pred_region
        _
      $region16: #{tpu_custom_call.1} parent=11 // pred_fallthru
        _
    $region12: #{tpu_custom_call.1} parent=5 // pred_fallthru
      _
    %p145 = scmp.lt.s32.totalorder %s10, 2
    // Predicated region
    $region17: #{tpu_custom_call.1} parent=5 // pred_check
      %p146 = pneg %p145
    $region18: #{tpu_custom_call.1} parent=5 // pred_check_branch
      %148 = sbr.rel (%p146) target = $region20
    $region19: #{tpu_custom_call.1} parent=5 // pred_region
      // Predicated region
      $region21: #{tpu_custom_call.1} parent=19 // pred_check
        %p149 = pneg %p65
      $region22: #{tpu_custom_call.1} parent=19 // pred_check_branch
        %151 = sbr.rel (%p149) target = $region24
      $region23: #{tpu_custom_call.1} parent=19 // pred_region
        %p152 = scmp.lt.s32.totalorder %s17, 1
        %s153 = scalar_select %p152, %s17, 1
        %p154 = scmp.lt.s32.totalorder %s18, 0
        %s155 = scalar_select %p154, %s18, 0
        %s156 = sadd.s32 %s155, %s153
        %s157 = smul.addr %s156, 8
        %s158 = scalar_lea.vmem %s1, %s157
      $region24: #{tpu_custom_call.1} parent=19 // pred_fallthru
        _
    $region20: #{tpu_custom_call.1} parent=5 // pred_fallthru
      _
    %p159 = scmp.le.s32.totalorder 1, %s10
    %p160 = scmp.lt.s32.totalorder %s10, 3
    %p161 = pnand %p159, %p160
    %p162 = pneg %p161
    // Predicated region
    $region25: #{tpu_custom_call.1} parent=5 // pred_check
      _
    $region26: #{tpu_custom_call.1} parent=5 // pred_check_branch
      %164 = sbr.rel (%p161) target = $region28
    $region27: #{tpu_custom_call.1} parent=5 // pred_region
      %s165 = ssub.s32 %s10, 1
      %p166 = pneg %p43
      %p167 = pneg %p40
      %p168 = scmp.lt.s32.totalorder %s19, 1
      %s169 = scalar_select %p168, %s19, 1
      %p170 = scmp.lt.s32.totalorder %s20, 0
      %s171 = scalar_select %p170, %s20, 0
      %s172 = sadd.s32 %s171, %s169
      %s173 = smul.addr %s172, 8
      %s174 = scalar_lea.vmem %s1, %s173
      %p175 = pneg %p71
      %p176 = pneg %p68
      %p177 = pneg %p99
      %p178 = pneg %p96
      %p179 = scmp.lt.s32.totalorder %s19, 1
      %s180 = scalar_select %p179, %s19, 1
      %p181 = scmp.lt.s32.totalorder %s20, 0
      %s182 = scalar_select %p181, %s20, 0
      %s183 = sadd.s32 %s182, %s180
      %s184 = smul.addr %s183, 8
      %s185 = scalar_lea.vmem %s2, %s184
      %p186 = pneg %p127
      %p187 = pneg %p124
      %p188 = scmp.lt.s32.totalorder %s19, 1
      %s189 = scalar_select %p188, %s19, 1
      %p190 = scmp.lt.s32.totalorder %s20, 0
      %s191 = scalar_select %p190, %s20, 0
      %s192 = sadd.s32 %s191, %s189
      %s193 = smul.addr %s192, 8
      %s194 = scalar_lea.vmem %s3, %s193
      %p195 = scmp.lt.s32.totalorder %s19, 1
      %s196 = scalar_select %p195, %s19, 1
      %p197 = scmp.lt.s32.totalorder %s20, 0
      %s198 = scalar_select %p197, %s20, 0
      %s199 = sadd.s32 %s198, %s196
      %s200 = smul.addr %s199, 8
      %s201 = scalar_lea.vmem %s1, %s200
      %p202 = scmp.lt.s32.totalorder %s19, 1
      %s203 = scalar_select %p202, %s19, 1
      %p204 = scmp.lt.s32.totalorder %s20, 0
      %s205 = scalar_select %p204, %s20, 0
      %s206 = sadd.s32 %s205, %s203
      %s207 = smul.addr %s206, 8
      %s208 = scalar_lea.vmem %s2, %s207
      %p209 = scmp.lt.s32.totalorder %s19, 1
      %s210 = scalar_select %p209, %s19, 1
      %p211 = scmp.lt.s32.totalorder %s20, 0
      %s212 = scalar_select %p211, %s20, 0
      %s213 = sadd.s32 %s212, %s210
      %s214 = smul.addr %s213, 8
      %s215 = scalar_lea.vmem %s3, %s214
      %v216 = vld [vmem:[%s0] sm:$0xff]
      %v217 = vld [vmem:[%s201] sm:$0xff]
      %vm218 = vcmask 64512
      %v220 = vsel %vm218, %v216, 0
      %222 = vmatprep.subr.mxu0 0.0
      %223 = vmatpush1.msra.mxu0 0.0
      %224 = vmatprep.subr.mxu0 0.0
      %225 = vmatpush1.msra.mxu0 0.0
      %226 = vmatprep.subr.mxu0 0.0
      %227 = vmatpush1.msra.mxu0 0.0
      %228 = vmatprep.subr.mxu0 0.0
      %229 = vmatpush1.msra.mxu0 0.0
      %230 = vmatprep.subr.mxu0 0.0
      %231 = vmatpush1.msra.mxu0 0.0
      %232 = vmatprep.subr.mxu0 0.0
      %233 = vmatpush1.msra.mxu0 0.0
      %234 = vmatprep.subr.mxu0 0.0
      %235 = vmatpush1.msra.mxu0 0.0
      %236 = vmatprep.subr.mxu0 0.0
      %237 = vmatpush1.msra.mxu0 0.0
      %238 = vmatprep.subr.mxu0 0.0
      %239 = vmatpush1.msra.mxu0 0.0
      %240 = vmatprep.subr.mxu0 0.0
      %241 = vmatpush1.msra.mxu0 0.0
      %242 = vmatprep.subr.mxu0 0.0
      %243 = vmatpush1.msra.mxu0 0.0
      %244 = vmatprep.subr.mxu0 0.0
      %245 = vmatpush1.msra.mxu0 0.0
      %246 = vmatprep.subr.mxu0 0.0
      %247 = vmatpush1.msra.mxu0 0.0
      %248 = vmatprep.subr.mxu0 0.0
      %249 = vmatpush1.msra.mxu0 0.0
      %250 = vmatprep.subr.mxu0 0.0
      %251 = vmatpush1.msra.mxu0 0.0
      %252 = vmatprep.subr.mxu0 0.0
      %253 = vmatpush1.msra.mxu0 %v217
      %254 = vmatprep.subr.mxu0 0.0
      %255 = vmatpush2.msra.mxu0 0.0
      %256 = vmatprep.subr.mxu0 0.0
      %257 = vmatpush2.msra.mxu0 0.0
      %258 = vmatprep.subr.mxu0 0.0
      %259 = vmatpush2.msra.mxu0 0.0
      %260 = vmatprep.subr.mxu0 0.0
      %261 = vmatpush2.msra.mxu0 0.0
      %262 = vmatprep.subr.mxu0 0.0
      %263 = vmatpush2.msra.mxu0 0.0
      %264 = vmatprep.subr.mxu0 0.0
      %265 = vmatpush2.msra.mxu0 0.0
      %266 = vmatprep.subr.mxu0 0.0
      %267 = vmatpush2.msra.mxu0 0.0
      %268 = vmatprep.subr.mxu0 0.0
      %269 = vmatpush2.msra.mxu0 0.0
      %270 = vmatprep.subr.mxu0 0.0
      %271 = vmatpush2.msra.mxu0 0.0
      %272 = vmatprep.subr.mxu0 0.0
      %273 = vmatpush2.msra.mxu0 0.0
      %274 = vmatprep.subr.mxu0 0.0
      %275 = vmatpush2.msra.mxu0 0.0
      %276 = vmatprep.subr.mxu0 0.0
      %277 = vmatpush2.msra.mxu0 0.0
      %278 = vmatprep.subr.mxu0 0.0
      %279 = vmatpush2.msra.mxu0 0.0
      %280 = vmatprep.subr.mxu0 0.0
      %281 = vmatpush2.msra.mxu0 0.0
      %282 = vmatprep.subr.mxu0 0.0
      %283 = vmatpush2.msra.mxu0 0.0
      %284 = vmatprep.subr.mxu0 0.0
      %285 = vmatpush2.msra.mxu0 0.0
      %286 = vmatprep.mubr.f32.mxu0 0.0
      %287 = vmatmul.mubr.f32.gmra.mxu0 %v220
      %v288 = vpop.f32.mrf.mxu0
      %v289 = vadd.f32 0.0, %v288
      %v290 = vpop.f32.mrf.mxu0
      %291 = vdwg.mxu0
      %vm292 = vcmask 31744
      %293 = vst.msk [vmem:[%s208] sm:$0xff] %vm292, %v289
      %v294 = vsub.f32 %v217, %v289
      %295 = vst.msk [vmem:[%s215] sm:$0xff] %vm292, %v294
      %p296 = scmp.lt.s32.totalorder %s19, 1
      %s297 = scalar_select %p296, %s19, 1
      %p298 = scmp.lt.s32.totalorder %s20, 0
      %s299 = scalar_select %p298, %s20, 0
      %s300 = sadd.s32 %s299, %s297
      %s301 = smul.addr %s300, 8
      %s302 = scalar_lea.vmem %s2, %s301
      %p303 = scmp.lt.s32.totalorder %s19, 1
      %s304 = scalar_select %p303, %s19, 1
      %p305 = scmp.lt.s32.totalorder %s20, 0
      %s306 = scalar_select %p305, %s20, 0
      %s307 = sadd.s32 %s306, %s304
      %s308 = smul.addr %s307, 8
      %s309 = scalar_lea.vmem %s3, %s308
      // Predicated region
      $region29: #{tpu_custom_call.1} parent=27 // pred_check
        %p310 = pneg %p96
      $region30: #{tpu_custom_call.1} parent=27 // pred_check_branch
        %312 = sbr.rel (%p310) target = $region32
      $region31: #{tpu_custom_call.1} parent=27 // pred_region
        _
      $region32: #{tpu_custom_call.1} parent=27 // pred_fallthru
        _
      // Predicated region
      $region33: #{tpu_custom_call.1} parent=27 // pred_check
        %p313 = pneg %p124
      $region34: #{tpu_custom_call.1} parent=27 // pred_check_branch
        %315 = sbr.rel (%p313) target = $region36
      $region35: #{tpu_custom_call.1} parent=27 // pred_region
        _
      $region36: #{tpu_custom_call.1} parent=27 // pred_fallthru
        _
    $region28: #{tpu_custom_call.1} parent=5 // pred_fallthru
      _
    %p316 = scmp.le.s32.totalorder 2, %s10
    // Predicated region
    $region37: #{tpu_custom_call.1} parent=5 // pred_check
      %p317 = pneg %p316
    $region38: #{tpu_custom_call.1} parent=5 // pred_check_branch
      %319 = sbr.rel (%p317) target = $region40
    $region39: #{tpu_custom_call.1} parent=5 // pred_region
      %s320 = ssub.s32 %s10, 2
      // Predicated region
      $region41: #{tpu_custom_call.1} parent=39 // pred_check
        %p321 = pneg %p102
      $region42: #{tpu_custom_call.1} parent=39 // pred_check_branch
        %323 = sbr.rel (%p321) target = $region44
      $region43: #{tpu_custom_call.1} parent=39 // pred_region
        %p324 = scmp.lt.s32.totalorder %s21, 1
        %s325 = scalar_select %p324, %s21, 1
        %p326 = scmp.lt.s32.totalorder %s22, 0
        %s327 = scalar_select %p326, %s22, 0
        %s328 = sadd.s32 %s327, %s325
        %s329 = smul.addr %s328, 8
        %s330 = scalar_lea.vmem %s2, %s329
      $region44: #{tpu_custom_call.1} parent=39 // pred_fallthru
        _
      // Predicated region
      $region45: #{tpu_custom_call.1} parent=39 // pred_check
        %p331 = pneg %p130
      $region46: #{tpu_custom_call.1} parent=39 // pred_check_branch
        %333 = sbr.rel (%p331) target = $region48
      $region47: #{tpu_custom_call.1} parent=39 // pred_region
        %p334 = scmp.lt.s32.totalorder %s21, 1
        %s335 = scalar_select %p334, %s21, 1
        %p336 = scmp.lt.s32.totalorder %s22, 0
        %s337 = scalar_select %p336, %s22, 0
        %s338 = sadd.s32 %s337, %s335
        %s339 = smul.addr %s338, 8
        %s340 = scalar_lea.vmem %s3, %s339
      $region48: #{tpu_custom_call.1} parent=39 // pred_fallthru
        _
    $region40: #{tpu_custom_call.1} parent=5 // pred_fallthru
      _
  $region6: #{tpu_custom_call.1} parent=0 // loop_footer
    %s14 = sadd.s32 1, %s10
  $region7: #{tpu_custom_call.1} parent=0 // loop_footer_branch
    %9 = sbr.rel target = $region3
  $region8: #{tpu_custom_call.1} parent=0 // loop_exit
    _

</llo_original>
